<compile_context>
chip_gen: v5e
topology: v5e:2x2
jax: 0.10.0
libtpu: 0.0.40
codegen_flags: <defaults>
</compile_context>

<pallas_src>
import functools

import jax
import jax.numpy as jnp
from jax.experimental import pallas as pl
from jax.experimental.pallas import tpu as pltpu


def actor_mfg_kernel(x_ref, w_in_ref, w_hid_ref, w_out_ref, b_all_ref, out_ref,
                     *, H, r_dim, b_dim, a_cols, out_pad):
    W3P = w_in_ref.shape[1]          # lane-padded 3*H (multiple of 128)
    TB = x_ref.shape[0]
    dot_dtype = w_in_ref.dtype       # bf16 MXU operands, f32 accumulate

    # x = torch.abs(x); net = self.net(x), replicated into [net | net | net | 0].
    x = jnp.abs(x_ref[...]).astype(dot_dtype)
    h = jnp.dot(x, w_in_ref[...], preferred_element_type=jnp.float32) \
        + b_all_ref[0:1, 0:W3P]

    # Hoisted per-lane ReLU floor: only the user segment (lanes >= 2H, plus the
    # zero pad lanes) is clamped each hidden layer; r/b chains are plain Linear.
    col = jax.lax.broadcasted_iota(jnp.int32, (TB, W3P), 1)
    neg_inf = jnp.float32(-jnp.inf)
    relu_floor = jnp.where(col >= 2 * H, jnp.float32(0.0), neg_inf)

    # Four fused (block-diagonal) hidden layers.
    for i in range(4):
        h = jnp.dot(h.astype(dot_dtype), w_hid_ref[i],
                    preferred_element_type=jnp.float32) \
            + b_all_ref[i + 1:i + 2, 0:W3P]
        h = jnp.maximum(h, relu_floor)

    # Fused output heads; columns are already in final slab order:
    #   [ r5 | b5 | user x r_dim | mean_b | mean_r | user x r_dim | pad ]
    head = jnp.dot(h.astype(dot_dtype), w_out_ref[...],
                   preferred_element_type=jnp.float32) \
        + b_all_ref[5:6, 0:out_pad]

    colO = col if out_pad == W3P else \
        jax.lax.broadcasted_iota(jnp.int32, (TB, out_pad), 1)
    rb = r_dim + b_dim
    # r_5 = relu(linear5_r), b_5 = relu(linear5_b); user head has no ReLU.
    head_floor = jnp.where(colO < rb, jnp.float32(0.0), neg_inf)
    head = jnp.maximum(head, head_floor)

    # torch.mean(r_5, 1) / torch.mean(b_5, 1) via masked lane reductions (XLU).
    mean_r = jnp.sum(jnp.where(colO < r_dim, head, 0.0), axis=1, keepdims=True) \
        * (1.0 / r_dim)
    mean_b = jnp.sum(jnp.where((colO >= r_dim) & (colO < rb), head, 0.0),
                     axis=1, keepdims=True) * (1.0 / b_dim)

    # batch>1 path: a_mean starts with [mean_b, mean_r] right after the `a` block.
    slab = jnp.where(colO == a_cols, mean_b, head)
    slab = jnp.where(colO == a_cols + 1, mean_r, slab)
    out_ref[...] = jnp.abs(slab)


def init_params(key, state_dim, r_dim, b_dim, o_dim, hidden_dim, init_w=0.003):
    """Deterministic parameter init mirroring PyTorch nn.Linear defaults."""
    u_dim = o_dim // r_dim
    del u_dim  # (implied by o_dim / r_dim; kept for clarity)
    keys = iter(jax.random.split(key, 64))

    def linear(in_f, out_f, w_range=None):
        rng_w = next(keys)
        rng_b = next(keys)
        bound = w_range if w_range is not None else 1.0 / (in_f ** 0.5)
        w = jax.random.uniform(rng_w, (in_f, out_f), jnp.float32, -bound, bound)
        b = jax.random.uniform(rng_b, (1, out_f), jnp.float32, -bound, bound)
        return w, b

    wnet, bnet = linear(state_dim, hidden_dim)

    def stacked_hidden():
        ws, bs = [], []
        for _ in range(4):
            w, b = linear(hidden_dim, hidden_dim)
            ws.append(w)
            bs.append(b)
        return jnp.stack(ws, 0), jnp.stack(bs, 0)  # (4, H, H), (4, 1, H)

    wrh, brh = stacked_hidden()
    wro, bro = linear(hidden_dim, r_dim, w_range=init_w)
    wbh, bbh = stacked_hidden()
    wbo, bbo = linear(hidden_dim, b_dim, w_range=init_w)
    wuh, buh = stacked_hidden()
    wuo, buo = linear(hidden_dim, o_dim // r_dim)

    return (wnet, bnet, wrh, brh, wro, bro, wbh, bbh, wbo, bbo,
            wuh, buh, wuo, buo)


def pack_params(params, lane=128, weight_dtype=jnp.bfloat16):
    """One-time host-side packing into 4 kernel-ready operands (bf16 weights)."""
    (wnet, bnet, wrh, brh, wro, bro, wbh, bbh, wbo, bbo,
     wuh, buh, wuo, buo) = params
    state_dim, H = wnet.shape
    W3 = 3 * H
    # TODO(synk): if hidden_dim grows so that 3*H > 128, split the hidden
    # layers into three separate dots instead of one block-diagonal dot (the
    # fusion would then do ~3x the MXU FLOPs).
    assert W3 <= lane, "block-diagonal branch fusion assumes 3*hidden_dim <= 128"
    W3P = ((W3 + lane - 1) // lane) * lane          # lane-padded fused width
    r_dim = wro.shape[1]
    b_dim = wbo.shape[1]
    u_dim = wuo.shape[1]
    a_cols = r_dim + b_dim + r_dim * u_dim
    am_cols = 2 + r_dim * u_dim
    total = a_cols + am_cols
    out_pad = ((total + lane - 1) // lane) * lane

    def lane_pad(v, width):
        return jnp.pad(v, ((0, 0), (0, width - v.shape[1])))

    # Input layer replicated across the three branch segments: [net|net|net|0].
    w_in = lane_pad(jnp.concatenate([wnet] * 3, axis=1), W3P)       # (S, W3P)
    b_in = lane_pad(jnp.concatenate([bnet] * 3, axis=1), W3P)       # (1, W3P)

    # Hidden layers as block-diagonal (4, W3P, W3P).
    z = jnp.zeros((4, H, H), jnp.float32)
    w_hid = jnp.concatenate([
        jnp.concatenate([wrh, z, z], axis=2),
        jnp.concatenate([z, wbh, z], axis=2),
        jnp.concatenate([z, z, wuh], axis=2)], axis=1)              # (4, 3H, 3H)
    w_hid = jnp.pad(w_hid, ((0, 0), (0, W3P - W3), (0, W3P - W3)))  # (4, W3P, W3P)
    b_hid = lane_pad(jnp.concatenate([brh, bbh, buh], axis=2).reshape(4, W3), W3P)

    # Fused output heads, columns laid out directly in final slab order:
    #   [ r5 | b5 | user x r_dim | mean_b | mean_r | user x r_dim | pad ]
    w_out = jnp.zeros((W3P, out_pad), jnp.float32)
    b_out = jnp.zeros((1, out_pad), jnp.float32)
    w_out = w_out.at[0:H, 0:r_dim].set(wro)
    b_out = b_out.at[0, 0:r_dim].set(bro[0])
    w_out = w_out.at[H:2 * H, r_dim:r_dim + b_dim].set(wbo)
    b_out = b_out.at[0, r_dim:r_dim + b_dim].set(bbo[0])
    for base in (r_dim + b_dim, a_cols + 2):
        for k in range(r_dim):
            off = base + k * u_dim
            w_out = w_out.at[2 * H:W3, off:off + u_dim].set(wuo)
            b_out = b_out.at[0, off:off + u_dim].set(buo[0])

    # All six bias rows packed into one f32 operand (elementwise path stays f32).
    BW = max(W3P, out_pad)
    b_all = jnp.concatenate(
        [lane_pad(b_in, BW)]
        + [lane_pad(b_hid[i:i + 1], BW) for i in range(4)]
        + [lane_pad(b_out, BW)], axis=0)                            # (6, BW)

    packed = (w_in.astype(weight_dtype), w_hid.astype(weight_dtype),
              w_out.astype(weight_dtype), b_all)
    dims = (int(H), int(r_dim), int(b_dim), int(a_cols), int(am_cols),
            int(out_pad))
    return packed, dims


@functools.partial(jax.jit, static_argnames=("dims",))
def actor_mfg_forward(x, packed, dims):
    H, r_dim, b_dim, a_cols, am_cols, out_pad = dims
    w_in, w_hid, w_out, b_all = packed
    B, state_dim = x.shape

    # Batch tile: >=512 rows per grid step for HBM-pipelining at deployed batch
    # sizes (also fills the MXU M dimension on v6e/v7x); at tiny batches just
    # pad to one 8-sublane tile and run a single grid step.
    TB = 512 if B >= 512 else max(8, ((B + 7) // 8) * 8)
    B_pad = ((B + TB - 1) // TB) * TB
    x_p = jnp.pad(x, ((0, B_pad - B), (0, 0))) if B_pad != B else x

    kern = functools.partial(actor_mfg_kernel, H=H, r_dim=r_dim, b_dim=b_dim,
                             a_cols=a_cols, out_pad=out_pad)
    slab = pl.pallas_call(
        kern,
        out_shape=jax.ShapeDtypeStruct((B_pad, out_pad), jnp.float32),
        grid=(B_pad // TB,),
        in_specs=[
            pl.BlockSpec((TB, state_dim), lambda i: (i, 0)),
            # Weights / biases: block 0 every step -> stay VMEM-resident.
            pl.BlockSpec(w_in.shape, lambda i: (0, 0)),
            pl.BlockSpec(w_hid.shape, lambda i: (0, 0, 0)),
            pl.BlockSpec(w_out.shape, lambda i: (0, 0)),
            pl.BlockSpec(b_all.shape, lambda i: (0, 0)),
        ],
        out_specs=pl.BlockSpec((TB, out_pad), lambda i: (i, 0)),
        compiler_params=pltpu.CompilerParams(
            dimension_semantics=("parallel",)),   # megacore sharding on v7x
    )(x_p, w_in, w_hid, w_out, b_all)

    slab = slab[:B]
    # NOTE: downstream Pallas consumers should take `slab` directly (lane-dense)
    # and slice at the final consumer; the narrow slices below are for parity
    # with the PyTorch return signature.
    a = slab[:, :a_cols]
    if B == 1:
        # PyTorch batch==1 branch uses the opposite [mean_r, mean_b] order.
        # TODO(synk): the torch branch also moves the tensor to cuda; device
        # placement has no Pallas equivalent and is ignored.
        a_mean = jnp.concatenate(
            [slab[:, a_cols + 1:a_cols + 2], slab[:, a_cols:a_cols + 1],
             slab[:, a_cols + 2:a_cols + am_cols]], axis=1)
    else:
        a_mean = slab[:, a_cols:a_cols + am_cols]
    return a, a_mean


def actor_mfg_reference(x, params, r_dim):
    """Pure-JAX f32 reference matching the PyTorch forward (batch>1 path)."""
    (wnet, bnet, wrh, brh, wro, bro, wbh, bbh, wbo, bbo,
     wuh, buh, wuo, buo) = params
    x = jnp.abs(x)
    net = x @ wnet + bnet
    h = net
    for i in range(4):
        h = h @ wrh[i] + brh[i]
    r5 = jnp.maximum(h @ wro + bro, 0.0)
    h = net
    for i in range(4):
        h = h @ wbh[i] + bbh[i]
    b5 = jnp.maximum(h @ wbo + bbo, 0.0)
    h = net
    for i in range(4):
        h = jnp.maximum(h @ wuh[i] + buh[i], 0.0)
    user = h @ wuo + buo
    a = jnp.concatenate([r5, b5] + [user] * r_dim, axis=1)
    mean_r = jnp.mean(r5, axis=1, keepdims=True)
    mean_b = jnp.mean(b5, axis=1, keepdims=True)
    a_mean = jnp.concatenate([mean_b, mean_r] + [user] * r_dim, axis=1)
    return jnp.abs(a), jnp.abs(a_mean)


if __name__ == "__main__":
    # Small shapes consistent with the module's forward.
    batch = 2
    state_dim = 16
    hidden_dim = 32
    r_dim = 4
    b_dim = 4
    o_dim = 8  # o_dim / r_dim == 2

    key = jax.random.PRNGKey(0)
    k_x, k_p = jax.random.split(key)
    x = jax.random.normal(k_x, (batch, state_dim), jnp.float32)
    params = init_params(k_p, state_dim, r_dim, b_dim, o_dim, hidden_dim)
    packed, dims = pack_params(params)

    a, a_mean = actor_mfg_forward(x, packed, dims)
    jax.block_until_ready((a, a_mean))

    # Shape checks:
    #   a:      r_dim + b_dim + r_dim * (o_dim // r_dim) = 4 + 4 + 8 = 16
    #   a_mean: 2 + r_dim * (o_dim // r_dim)             = 2 + 8     = 10
    assert a.shape == (batch, r_dim + b_dim + r_dim * (o_dim // r_dim))
    assert a_mean.shape == (batch, 2 + r_dim * (o_dim // r_dim))

    # Numerical check against the pure-JAX f32 reference (bf16 dot operands,
    # f32 accumulation -> loosened tolerances).
    a_ref, am_ref = actor_mfg_reference(x, params, r_dim)
    assert jnp.allclose(a, a_ref, atol=1e-2, rtol=2e-2)
    assert jnp.allclose(a_mean, am_ref, atol=1e-2, rtol=2e-2)
    print("KERNEL_OK")
</pallas_src>

<mosaic_0001>
module attributes {stable_mosaic.version = 11 : i64} {
  func.func @actor_mfg_kernel(%arg0: i32, %arg1: memref<8x16xf32, #tpu.memory_space<vmem>>, %arg2: memref<16x128xbf16, #tpu.memory_space<vmem>>, %arg3: memref<4x128x128xbf16, #tpu.memory_space<vmem>>, %arg4: memref<128x128xbf16, #tpu.memory_space<vmem>>, %arg5: memref<6x128xf32, #tpu.memory_space<vmem>>, %arg6: memref<8x128xf32, #tpu.memory_space<vmem>>) attributes {dimension_semantics = [#tpu.dimension_semantics<parallel>], iteration_bounds = array<i64: 1>, scalar_prefetch = 0 : i64, scratch_operands = 0 : i64, tpu.core_type = #tpu.core_type<tc>, window_params = [{transform_indices = @transform_0, window_bounds = array<i64: 8, 16>}, {pipeline_mode = #tpu.pipeline_mode<synchronous>, transform_indices = @transform_1, window_bounds = array<i64: 16, 128>}, {pipeline_mode = #tpu.pipeline_mode<synchronous>, transform_indices = @transform_2, window_bounds = array<i64: 4, 128, 128>}, {pipeline_mode = #tpu.pipeline_mode<synchronous>, transform_indices = @transform_3, window_bounds = array<i64: 128, 128>}, {pipeline_mode = #tpu.pipeline_mode<synchronous>, transform_indices = @transform_4, window_bounds = array<i64: 6, 128>}, {transform_indices = @transform_5, window_bounds = array<i64: 8, 128>}]} {
    %c0 = arith.constant 0 : index
    %c0_0 = arith.constant 0 : index
    %0 = vector.load %arg1[%c0, %c0_0] : memref<8x16xf32, #tpu.memory_space<vmem>>, vector<8x16xf32>
    %1 = math.absf %0 : vector<8x16xf32>
    %2 = arith.truncf %1 : vector<8x16xf32> to vector<8x16xbf16>
    %c0_1 = arith.constant 0 : index
    %c0_2 = arith.constant 0 : index
    %3 = vector.load %arg2[%c0_1, %c0_2] : memref<16x128xbf16, #tpu.memory_space<vmem>>, vector<16x128xbf16>
    %cst = arith.constant dense<0.000000e+00> : vector<8x128xf32>
    %4 = tpu.matmul %2, %3, %cst {dimension_numbers = #tpu.dot_dimension_numbers<[1], [0], [0], [1], [0, 0, 1, 1], [], []>} : vector<8x16xbf16>, vector<16x128xbf16>, vector<8x128xf32> -> vector<8x128xf32>
    %c0_3 = arith.constant 0 : index
    %c0_4 = arith.constant 0 : index
    %5 = vector.load %arg5[%c0_3, %c0_4] : memref<6x128xf32, #tpu.memory_space<vmem>>, vector<1x128xf32>
    %6 = vector.broadcast %5 : vector<1x128xf32> to vector<8x128xf32>
    %7 = arith.addf %4, %6 : vector<8x128xf32>
    %8 = tpu.iota {dimensions = array<i32: 1>} : vector<8x128xi32>
    %c64_i32 = arith.constant 64 : i32
    %9 = vector.broadcast %c64_i32 : i32 to vector<8x128xi32>
    %10 = arith.cmpi sge, %8, %9 : vector<8x128xi32>
    %cst_5 = arith.constant 0.000000e+00 : f32
    %cst_6 = arith.constant 0xFF800000 : f32
    %11 = vector.broadcast %cst_5 : f32 to vector<8x128xf32>
    %12 = vector.broadcast %cst_6 : f32 to vector<8x128xf32>
    %13 = arith.select %10, %11, %12 : vector<8x128xi1>, vector<8x128xf32>
    %14 = arith.truncf %7 : vector<8x128xf32> to vector<8x128xbf16>
    %c0_7 = arith.constant 0 : index
    %c0_8 = arith.constant 0 : index
    %c0_9 = arith.constant 0 : index
    %15 = vector.load %arg3[%c0_7, %c0_8, %c0_9] : memref<4x128x128xbf16, #tpu.memory_space<vmem>>, vector<1x128x128xbf16>
    %16 = vector.shape_cast %15 : vector<1x128x128xbf16> to vector<128x128xbf16>
    %cst_10 = arith.constant dense<0.000000e+00> : vector<8x128xf32>
    %17 = tpu.matmul %14, %16, %cst_10 {dimension_numbers = #tpu.dot_dimension_numbers<[1], [0], [0], [1], [0, 0, 1, 1], [], []>} : vector<8x128xbf16>, vector<128x128xbf16>, vector<8x128xf32> -> vector<8x128xf32>
    %c1 = arith.constant 1 : index
    %c0_11 = arith.constant 0 : index
    %18 = vector.load %arg5[%c1, %c0_11] : memref<6x128xf32, #tpu.memory_space<vmem>>, vector<1x128xf32>
    %19 = vector.broadcast %18 : vector<1x128xf32> to vector<8x128xf32>
    %20 = arith.addf %17, %19 : vector<8x128xf32>
    %21 = arith.maximumf %20, %13 : vector<8x128xf32>
    %22 = arith.truncf %21 : vector<8x128xf32> to vector<8x128xbf16>
    %c1_12 = arith.constant 1 : index
    %c0_13 = arith.constant 0 : index
    %c0_14 = arith.constant 0 : index
    %23 = vector.load %arg3[%c1_12, %c0_13, %c0_14] : memref<4x128x128xbf16, #tpu.memory_space<vmem>>, vector<1x128x128xbf16>
    %24 = vector.shape_cast %23 : vector<1x128x128xbf16> to vector<128x128xbf16>
    %cst_15 = arith.constant dense<0.000000e+00> : vector<8x128xf32>
    %25 = tpu.matmul %22, %24, %cst_15 {dimension_numbers = #tpu.dot_dimension_numbers<[1], [0], [0], [1], [0, 0, 1, 1], [], []>} : vector<8x128xbf16>, vector<128x128xbf16>, vector<8x128xf32> -> vector<8x128xf32>
    %c2 = arith.constant 2 : index
    %c0_16 = arith.constant 0 : index
    %26 = vector.load %arg5[%c2, %c0_16] : memref<6x128xf32, #tpu.memory_space<vmem>>, vector<1x128xf32>
    %27 = vector.broadcast %26 : vector<1x128xf32> to vector<8x128xf32>
    %28 = arith.addf %25, %27 : vector<8x128xf32>
    %29 = arith.maximumf %28, %13 : vector<8x128xf32>
    %30 = arith.truncf %29 : vector<8x128xf32> to vector<8x128xbf16>
    %c2_17 = arith.constant 2 : index
    %c0_18 = arith.constant 0 : index
    %c0_19 = arith.constant 0 : index
    %31 = vector.load %arg3[%c2_17, %c0_18, %c0_19] : memref<4x128x128xbf16, #tpu.memory_space<vmem>>, vector<1x128x128xbf16>
    %32 = vector.shape_cast %31 : vector<1x128x128xbf16> to vector<128x128xbf16>
    %cst_20 = arith.constant dense<0.000000e+00> : vector<8x128xf32>
    %33 = tpu.matmul %30, %32, %cst_20 {dimension_numbers = #tpu.dot_dimension_numbers<[1], [0], [0], [1], [0, 0, 1, 1], [], []>} : vector<8x128xbf16>, vector<128x128xbf16>, vector<8x128xf32> -> vector<8x128xf32>
    %c3 = arith.constant 3 : index
    %c0_21 = arith.constant 0 : index
    %34 = vector.load %arg5[%c3, %c0_21] : memref<6x128xf32, #tpu.memory_space<vmem>>, vector<1x128xf32>
    %35 = vector.broadcast %34 : vector<1x128xf32> to vector<8x128xf32>
    %36 = arith.addf %33, %35 : vector<8x128xf32>
    %37 = arith.maximumf %36, %13 : vector<8x128xf32>
    %38 = arith.truncf %37 : vector<8x128xf32> to vector<8x128xbf16>
    %c3_22 = arith.constant 3 : index
    %c0_23 = arith.constant 0 : index
    %c0_24 = arith.constant 0 : index
    %39 = vector.load %arg3[%c3_22, %c0_23, %c0_24] : memref<4x128x128xbf16, #tpu.memory_space<vmem>>, vector<1x128x128xbf16>
    %40 = vector.shape_cast %39 : vector<1x128x128xbf16> to vector<128x128xbf16>
    %cst_25 = arith.constant dense<0.000000e+00> : vector<8x128xf32>
    %41 = tpu.matmul %38, %40, %cst_25 {dimension_numbers = #tpu.dot_dimension_numbers<[1], [0], [0], [1], [0, 0, 1, 1], [], []>} : vector<8x128xbf16>, vector<128x128xbf16>, vector<8x128xf32> -> vector<8x128xf32>
    %c4 = arith.constant 4 : index
    %c0_26 = arith.constant 0 : index
    %42 = vector.load %arg5[%c4, %c0_26] : memref<6x128xf32, #tpu.memory_space<vmem>>, vector<1x128xf32>
    %43 = vector.broadcast %42 : vector<1x128xf32> to vector<8x128xf32>
    %44 = arith.addf %41, %43 : vector<8x128xf32>
    %45 = arith.maximumf %44, %13 : vector<8x128xf32>
    %46 = arith.truncf %45 : vector<8x128xf32> to vector<8x128xbf16>
    %c0_27 = arith.constant 0 : index
    %c0_28 = arith.constant 0 : index
    %47 = vector.load %arg4[%c0_27, %c0_28] : memref<128x128xbf16, #tpu.memory_space<vmem>>, vector<128x128xbf16>
    %cst_29 = arith.constant dense<0.000000e+00> : vector<8x128xf32>
    %48 = tpu.matmul %46, %47, %cst_29 {dimension_numbers = #tpu.dot_dimension_numbers<[1], [0], [0], [1], [0, 0, 1, 1], [], []>} : vector<8x128xbf16>, vector<128x128xbf16>, vector<8x128xf32> -> vector<8x128xf32>
    %c5 = arith.constant 5 : index
    %c0_30 = arith.constant 0 : index
    %49 = vector.load %arg5[%c5, %c0_30] : memref<6x128xf32, #tpu.memory_space<vmem>>, vector<1x128xf32>
    %50 = vector.broadcast %49 : vector<1x128xf32> to vector<8x128xf32>
    %51 = arith.addf %48, %50 : vector<8x128xf32>
    %c8_i32 = arith.constant 8 : i32
    %52 = vector.broadcast %c8_i32 : i32 to vector<8x128xi32>
    %53 = arith.cmpi slt, %8, %52 : vector<8x128xi32>
    %cst_31 = arith.constant 0.000000e+00 : f32
    %cst_32 = arith.constant 0xFF800000 : f32
    %54 = vector.broadcast %cst_31 : f32 to vector<8x128xf32>
    %55 = vector.broadcast %cst_32 : f32 to vector<8x128xf32>
    %56 = arith.select %53, %54, %55 : vector<8x128xi1>, vector<8x128xf32>
    %57 = arith.maximumf %51, %56 : vector<8x128xf32>
    %c4_i32 = arith.constant 4 : i32
    %58 = vector.broadcast %c4_i32 : i32 to vector<8x128xi32>
    %59 = arith.cmpi slt, %8, %58 : vector<8x128xi32>
    %cst_33 = arith.constant 0.000000e+00 : f32
    %60 = vector.broadcast %cst_33 : f32 to vector<8x128xf32>
    %61 = arith.select %59, %57, %60 : vector<8x128xi1>, vector<8x128xf32>
    %cst_34 = arith.constant dense<0.000000e+00> : vector<8xf32>
    %62 = vector.multi_reduction <add>, %61, %cst_34 [1] : vector<8x128xf32> to vector<8xf32>
    %63 = vector.shape_cast %62 : vector<8xf32> to vector<8x1xf32>
    %cst_35 = arith.constant 2.500000e-01 : f32
    %64 = vector.broadcast %cst_35 : f32 to vector<8x1xf32>
    %65 = arith.mulf %63, %64 : vector<8x1xf32>
    %c4_i32_36 = arith.constant 4 : i32
    %66 = vector.broadcast %c4_i32_36 : i32 to vector<8x128xi32>
    %67 = arith.cmpi sge, %8, %66 : vector<8x128xi32>
    %c8_i32_37 = arith.constant 8 : i32
    %68 = vector.broadcast %c8_i32_37 : i32 to vector<8x128xi32>
    %69 = arith.cmpi slt, %8, %68 : vector<8x128xi32>
    %70 = arith.andi %67, %69 : vector<8x128xi1>
    %cst_38 = arith.constant 0.000000e+00 : f32
    %71 = vector.broadcast %cst_38 : f32 to vector<8x128xf32>
    %72 = arith.select %70, %57, %71 : vector<8x128xi1>, vector<8x128xf32>
    %cst_39 = arith.constant dense<0.000000e+00> : vector<8xf32>
    %73 = vector.multi_reduction <add>, %72, %cst_39 [1] : vector<8x128xf32> to vector<8xf32>
    %74 = vector.shape_cast %73 : vector<8xf32> to vector<8x1xf32>
    %cst_40 = arith.constant 2.500000e-01 : f32
    %75 = vector.broadcast %cst_40 : f32 to vector<8x1xf32>
    %76 = arith.mulf %74, %75 : vector<8x1xf32>
    %c16_i32 = arith.constant 16 : i32
    %77 = vector.broadcast %c16_i32 : i32 to vector<8x128xi32>
    %78 = arith.cmpi eq, %8, %77 : vector<8x128xi32>
    %79 = vector.shape_cast %76 : vector<8x1xf32> to vector<8x1xf32>
    %80 = vector.broadcast %79 : vector<8x1xf32> to vector<8x128xf32>
    %81 = arith.select %78, %80, %57 : vector<8x128xi1>, vector<8x128xf32>
    %c17_i32 = arith.constant 17 : i32
    %82 = vector.broadcast %c17_i32 : i32 to vector<8x128xi32>
    %83 = arith.cmpi eq, %8, %82 : vector<8x128xi32>
    %84 = vector.shape_cast %65 : vector<8x1xf32> to vector<8x1xf32>
    %85 = vector.broadcast %84 : vector<8x1xf32> to vector<8x128xf32>
    %86 = arith.select %83, %85, %81 : vector<8x128xi1>, vector<8x128xf32>
    %87 = math.absf %86 : vector<8x128xf32>
    %c0_41 = arith.constant 0 : index
    %c0_42 = arith.constant 0 : index
    %88 = vector.load %arg6[%c0_41, %c0_42] : memref<8x128xf32, #tpu.memory_space<vmem>>, vector<8x128xf32>
    tpu.vector_store %arg6[%c0_41, %c0_42], %87 {strides = array<i32>} : memref<8x128xf32, #tpu.memory_space<vmem>>, vector<8x128xf32>,
    return
  }
  func.func @transform_0(%arg0: i32) -> (i32, i32) {
    %c0_i32 = arith.constant 0 : i32
    %c0_i32_0 = arith.constant 0 : i32
    return %arg0, %c0_i32 : i32, i32
  }
  func.func @transform_1(%arg0: i32) -> (i32, i32) {
    %c0_i32 = arith.constant 0 : i32
    %c0_i32_0 = arith.constant 0 : i32
    %c0_i32_1 = arith.constant 0 : i32
    return %c0_i32, %c0_i32_0 : i32, i32
  }
  func.func @transform_2(%arg0: i32) -> (i32, i32, i32) {
    %c0_i32 = arith.constant 0 : i32
    %c0_i32_0 = arith.constant 0 : i32
    %c0_i32_1 = arith.constant 0 : i32
    %c0_i32_2 = arith.constant 0 : i32
    return %c0_i32, %c0_i32_0, %c0_i32_1 : i32, i32, i32
  }
  func.func @transform_3(%arg0: i32) -> (i32, i32) {
    %c0_i32 = arith.constant 0 : i32
    %c0_i32_0 = arith.constant 0 : i32
    %c0_i32_1 = arith.constant 0 : i32
    return %c0_i32, %c0_i32_0 : i32, i32
  }
  func.func @transform_4(%arg0: i32) -> (i32, i32) {
    %c0_i32 = arith.constant 0 : i32
    %c0_i32_0 = arith.constant 0 : i32
    %c0_i32_1 = arith.constant 0 : i32
    return %c0_i32, %c0_i32_0 : i32, i32
  }
  func.func @transform_5(%arg0: i32) -> (i32, i32) {
    %c0_i32 = arith.constant 0 : i32
    %c0_i32_0 = arith.constant 0 : i32
    return %arg0, %c0_i32 : i32, i32
  }
}

</mosaic_0001>

<llo_original>
// kernel: actor_mfg_forward.1
$region0: #{actor_mfg_forward.1}
  #allocation0 [shape = 'u32[]', space=smem, size = 0x4, offset = 0x4, fixed_abs, tag = 'smem constant byte address 0x4 - core index']
  #allocation1 [shape = 'u32[72,128]{1,0:T(1,128)}', space=vmem, size = 0x9000, scoped, tag = 'internal scratch']
  %s0 = inlined_call_operand.vmem [shape: f32[8,16], index: 0, kind: input, shape index: {}]
  %s1 = inlined_call_operand.vmem [shape: bf16[16,128], index: 1, kind: input, shape index: {}]
  %s2 = inlined_call_operand.hbm [shape: bf16[4,128,128], index: 2, kind: input, shape index: {}]
  %s3 = inlined_call_operand.hbm [shape: bf16[128,128], index: 3, kind: input, shape index: {}]
  %s4 = inlined_call_operand.hbm [shape: f32[6,128], index: 4, kind: input, shape index: {}]
  %s5 = inlined_call_operand.vmem [shape: f32[8,128], index: 5, kind: output, shape index: {}]
  %s6 = sld [smem:[#allocation0]]
  $region42: #{actor_mfg_forward.1} parent=0
    _
  %s8 = ssub.s32 1, %s6
  %s9 = scalar_select 0, %s8, %s6
  $region1: #{actor_mfg_forward.1} parent=0
    #allocation2 [shape = 'u8[131072]{0}', space=vmem, size = 0x20000, scoped, tag = 'input window, operand 2, single buffered']
    #allocation3 [shape = 's32[1]{0}', space=sflag, size = 0x4, scoped, tag = 'scoped memory for actor_mfg_forward.1']
    #allocation4 [shape = 'u8[32768]{0}', space=vmem, size = 0x8000, scoped, tag = 'input window, operand 3, single buffered']
    #allocation5 [shape = 's32[1]{0}', space=sflag, size = 0x4, scoped, tag = 'scoped memory for actor_mfg_forward.1']
    #allocation6 [shape = 'u8[4096]{0}', space=vmem, size = 0x1000, scoped, tag = 'input window, operand 4, single buffered']
    %10 = vsyncpa [#allocation3], 0
    %11 = vsyncpa [#allocation5], 0
    // Predicated region
    $region2: #{actor_mfg_forward.1} parent=1 // pred_check
      _
    $region3: #{actor_mfg_forward.1} parent=1 // pred_check_branch
      %13 = sbr.rel (0) target = $region5
    $region4: #{actor_mfg_forward.1} parent=1 // pred_region
      _
    $region5: #{actor_mfg_forward.1} parent=1 // pred_fallthru
      _
    // Predicated region
    $region6: #{actor_mfg_forward.1} parent=1 // pred_check
      _
    $region7: #{actor_mfg_forward.1} parent=1 // pred_check_branch
      %15 = sbr.rel (0) target = $region9
    $region8: #{actor_mfg_forward.1} parent=1 // pred_region
      _
    $region9: #{actor_mfg_forward.1} parent=1 // pred_fallthru
      _
    // Predicated region
    $region10: #{actor_mfg_forward.1} parent=1 // pred_check
      _
    $region11: #{actor_mfg_forward.1} parent=1 // pred_check_branch
      %17 = sbr.rel (0) target = $region13
    $region12: #{actor_mfg_forward.1} parent=1 // pred_region
      %19 = vsyncadd [#allocation3], 0
      %s20 = sshll.u32 %s2, 4
      %s21 = int_to_ptr.hbm [resolvable:$true] %s20
      %s22 = sshll.u32 [#allocation2], 4
      %s23 = int_to_ptr.vmem [resolvable:$true] %s22
      %28 = dma.hbm_to_vmem [thread:$0]  %s21, 4096, %s23, [#allocation3], 64, 64, 4
    $region13: #{actor_mfg_forward.1} parent=1 // pred_fallthru
      _
    // Predicated region
    $region14: #{actor_mfg_forward.1} parent=1 // pred_check
      _
    $region15: #{actor_mfg_forward.1} parent=1 // pred_check_branch
      %30 = sbr.rel (0) target = $region17
    $region16: #{actor_mfg_forward.1} parent=1 // pred_region
      %32 = vsyncadd [#allocation5], 0
      %s33 = sshll.u32 %s3, 4
      %s34 = int_to_ptr.hbm [resolvable:$true] %s33
      %s35 = sshll.u32 [#allocation4], 4
      %s36 = int_to_ptr.vmem [resolvable:$true] %s35
      %41 = dma.hbm_to_vmem [thread:$0]  %s34, 1024, %s36, [#allocation5], 64, 64, 4
    $region17: #{actor_mfg_forward.1} parent=1 // pred_fallthru
      _
    // Predicated region
    $region18: #{actor_mfg_forward.1} parent=1 // pred_check
      _
    $region19: #{actor_mfg_forward.1} parent=1 // pred_check_branch
      %43 = sbr.rel (0) target = $region21
    $region20: #{actor_mfg_forward.1} parent=1 // pred_region
      %45 = vsyncadd [#allocation5], 0
      %s47 = sshll.u32 %s4, 4
      %s48 = int_to_ptr.hbm [resolvable:$true] %s47
      %s49 = sshll.u32 [#allocation6], 4
      %s50 = int_to_ptr.vmem [resolvable:$true] %s49
      %52 = dma.hbm_to_vmem [thread:$0]  %s48, 128, %s50, [#allocation5]
    $region21: #{actor_mfg_forward.1} parent=1 // pred_fallthru
      _
    // Predicated region
    $region22: #{actor_mfg_forward.1} parent=1 // pred_check
      _
    $region23: #{actor_mfg_forward.1} parent=1 // pred_check_branch
      %54 = sbr.rel (0) target = $region25
    $region24: #{actor_mfg_forward.1} parent=1 // pred_region
      %56 = dma.done [#allocation3], 4096
    $region25: #{actor_mfg_forward.1} parent=1 // pred_fallthru
      _
    // Predicated region
    $region26: #{actor_mfg_forward.1} parent=1 // pred_check
      _
    $region27: #{actor_mfg_forward.1} parent=1 // pred_check_branch
      %58 = sbr.rel (0) target = $region29
    $region28: #{actor_mfg_forward.1} parent=1 // pred_region
      %60 = dma.done [#allocation5], 1024
    $region29: #{actor_mfg_forward.1} parent=1 // pred_fallthru
      _
    // Predicated region
    $region30: #{actor_mfg_forward.1} parent=1 // pred_check
      _
    $region31: #{actor_mfg_forward.1} parent=1 // pred_check_branch
      %62 = sbr.rel (0) target = $region33
    $region32: #{actor_mfg_forward.1} parent=1 // pred_region
      %64 = dma.done [#allocation5], 128
    $region33: #{actor_mfg_forward.1} parent=1 // pred_fallthru
      _
    %v66 = vld [vmem:[%s0] sm:$0xff]
    %v67 = vand.u32 2147483647, %v66
    %v68 = vpack.c.bf16 %v67, %v67
    %v69 = vld [vmem:[%s1] sm:$0xf]
    %v70 = vld [vmem:[%s1 + $0x4] sm:$0xf]
    %v71 = vld [vmem:[#allocation6] sm:$0x1]
    %v72 = vperm.slane %v71, 0
    %v75 = vunpack.c.l.b16 %v69
    %v76 = vunpack.c.l.b16 %v70
    %v77 = vpack.c.b16 %v76, %v75
    %vm79 = vcmask 130048
    %v81 = vsel %vm79, %v68, 0
    %83 = vmatpush.bf16.msra.mxu0 0
    %84 = vmatpush.bf16.msra.mxu0 0
    %85 = vmatpush.bf16.msra.mxu0 0
    %86 = vmatpush.bf16.msra.mxu0 0
    %87 = vmatpush.bf16.msra.mxu0 0
    %88 = vmatpush.bf16.msra.mxu0 0
    %89 = vmatpush.bf16.msra.mxu0 0
    %90 = vmatpush.bf16.msra.mxu0 %v77
    %91 = vmatmul.bf16.gmra.mxu0 %v81
    %v92 = vpop.f32.mrf.mxu0
    %v93 = vadd.f32 %v72, %v92
    %v94 = vpop.f32.mrf.mxu0
    %95 = vdwg.mxu0
    %v96 = vlaneseq
    %v97 = vand.u32 %v96, 127
    %vm98 = vcmp.ge.s32.totalorder %v97, 64
    %v99 = vsel %vm98, 0.0, -inf
    %v100 = vpack.c.bf16 %v93, %v93
    %v101 = vld [vmem:[#allocation2] sm:$0xf]
    %v102 = vld [vmem:[#allocation2 + $0x4] sm:$0xf]
    %v103 = vld [vmem:[#allocation2 + $0x8] sm:$0xf]
    %v104 = vld [vmem:[#allocation2 + $0xc] sm:$0xf]
    %v105 = vld [vmem:[#allocation2 + $0x10] sm:$0xf]
    %v106 = vld [vmem:[#allocation2 + $0x14] sm:$0xf]
    %v107 = vld [vmem:[#allocation2 + $0x18] sm:$0xf]
    %v108 = vld [vmem:[#allocation2 + $0x1c] sm:$0xf]
    %v109 = vld [vmem:[#allocation2 + $0x20] sm:$0xf]
    %v110 = vld [vmem:[#allocation2 + $0x24] sm:$0xf]
    %v111 = vld [vmem:[#allocation2 + $0x28] sm:$0xf]
    %v112 = vld [vmem:[#allocation2 + $0x2c] sm:$0xf]
    %v113 = vld [vmem:[#allocation2 + $0x30] sm:$0xf]
    %v114 = vld [vmem:[#allocation2 + $0x34] sm:$0xf]
    %v115 = vld [vmem:[#allocation2 + $0x38] sm:$0xf]
    %v116 = vld [vmem:[#allocation2 + $0x3c] sm:$0xf]
    %v117 = vld [vmem:[#allocation6 + $0x1] sm:$0x1]
    %v118 = vperm.slane %v117, 0
    %v135 = vunpack.c.l.b16 %v101
    %v136 = vunpack.c.l.b16 %v102
    %v137 = vunpack.c.l.b16 %v103
    %v138 = vunpack.c.l.b16 %v104
    %v139 = vunpack.c.l.b16 %v105
    %v140 = vunpack.c.l.b16 %v106
    %v141 = vunpack.c.l.b16 %v107
    %v142 = vunpack.c.l.b16 %v108
    %v143 = vunpack.c.l.b16 %v109
    %v144 = vunpack.c.l.b16 %v110
    %v145 = vunpack.c.l.b16 %v111
    %v146 = vunpack.c.l.b16 %v112
    %v147 = vunpack.c.l.b16 %v113
    %v148 = vunpack.c.l.b16 %v114
    %v149 = vunpack.c.l.b16 %v115
    %v150 = vunpack.c.l.b16 %v116
    %v151 = vpack.c.b16 %v136, %v135
    %v152 = vpack.c.b16 %v138, %v137
    %v153 = vpack.c.b16 %v140, %v139
    %v154 = vpack.c.b16 %v142, %v141
    %v155 = vpack.c.b16 %v144, %v143
    %v156 = vpack.c.b16 %v146, %v145
    %v157 = vpack.c.b16 %v148, %v147
    %v158 = vpack.c.b16 %v150, %v149
    %167 = vmatpush.bf16.msra.mxu0 %v158
    %168 = vmatpush.bf16.msra.mxu0 %v157
    %169 = vmatpush.bf16.msra.mxu0 %v156
    %170 = vmatpush.bf16.msra.mxu0 %v155
    %171 = vmatpush.bf16.msra.mxu0 %v154
    %172 = vmatpush.bf16.msra.mxu0 %v153
    %173 = vmatpush.bf16.msra.mxu0 %v152
    %174 = vmatpush.bf16.msra.mxu0 %v151
    %175 = vmatmul.bf16.gmra.mxu0 %v100
    %v176 = vpop.f32.mrf.mxu0
    %v177 = vadd.f32 %v118, %v176
    %v178 = vpop.f32.mrf.mxu0
    %179 = vdwg.mxu0
    %v180 = vmax.f32 %v177, %v99
    %v181 = vpack.c.bf16 %v180, %v180
    %s182 = scalar_lea.vmem [#allocation2], 64
    %v183 = vld [vmem:[%s182] sm:$0xf]
    %v184 = vld [vmem:[%s182 + $0x4] sm:$0xf]
    %v185 = vld [vmem:[%s182 + $0x8] sm:$0xf]
    %v186 = vld [vmem:[%s182 + $0xc] sm:$0xf]
    %v187 = vld [vmem:[%s182 + $0x10] sm:$0xf]
    %v188 = vld [vmem:[%s182 + $0x14] sm:$0xf]
    %v189 = vld [vmem:[%s182 + $0x18] sm:$0xf]
    %v190 = vld [vmem:[%s182 + $0x1c] sm:$0xf]
    %v191 = vld [vmem:[%s182 + $0x20] sm:$0xf]
    %v192 = vld [vmem:[%s182 + $0x24] sm:$0xf]
    %v193 = vld [vmem:[%s182 + $0x28] sm:$0xf]
    %v194 = vld [vmem:[%s182 + $0x2c] sm:$0xf]
    %v195 = vld [vmem:[%s182 + $0x30] sm:$0xf]
    %v196 = vld [vmem:[%s182 + $0x34] sm:$0xf]
    %v197 = vld [vmem:[%s182 + $0x38] sm:$0xf]
    %v198 = vld [vmem:[%s182 + $0x3c] sm:$0xf]
    %v199 = vld [vmem:[#allocation6 + $0x2] sm:$0x1]
    %v200 = vperm.slane %v199, 0
    %v217 = vunpack.c.l.b16 %v183
    %v218 = vunpack.c.l.b16 %v184
    %v219 = vunpack.c.l.b16 %v185
    %v220 = vunpack.c.l.b16 %v186
    %v221 = vunpack.c.l.b16 %v187
    %v222 = vunpack.c.l.b16 %v188
    %v223 = vunpack.c.l.b16 %v189
    %v224 = vunpack.c.l.b16 %v190
    %v225 = vunpack.c.l.b16 %v191
    %v226 = vunpack.c.l.b16 %v192
    %v227 = vunpack.c.l.b16 %v193
    %v228 = vunpack.c.l.b16 %v194
    %v229 = vunpack.c.l.b16 %v195
    %v230 = vunpack.c.l.b16 %v196
    %v231 = vunpack.c.l.b16 %v197
    %v232 = vunpack.c.l.b16 %v198
    %v233 = vpack.c.b16 %v218, %v217
    %v234 = vpack.c.b16 %v220, %v219
    %v235 = vpack.c.b16 %v222, %v221
    %v236 = vpack.c.b16 %v224, %v223
    %v237 = vpack.c.b16 %v226, %v225
    %v238 = vpack.c.b16 %v228, %v227
    %v239 = vpack.c.b16 %v230, %v229
    %v240 = vpack.c.b16 %v232, %v231
    %249 = vmatpush.bf16.msra.mxu0 %v240
    %250 = vmatpush.bf16.msra.mxu0 %v239
    %251 = vmatpush.bf16.msra.mxu0 %v238
    %252 = vmatpush.bf16.msra.mxu0 %v237
    %253 = vmatpush.bf16.msra.mxu0 %v236
    %254 = vmatpush.bf16.msra.mxu0 %v235
    %255 = vmatpush.bf16.msra.mxu0 %v234
    %256 = vmatpush.bf16.msra.mxu0 %v233
    %257 = vmatmul.bf16.gmra.mxu0 %v181
    %v258 = vpop.f32.mrf.mxu0
    %v259 = vadd.f32 %v200, %v258
    %v260 = vpop.f32.mrf.mxu0
    %261 = vdwg.mxu0
    %v262 = vmax.f32 %v259, %v99
    %v263 = vpack.c.bf16 %v262, %v262
    %s264 = scalar_lea.vmem [#allocation2], 128
    %v265 = vld [vmem:[%s264] sm:$0xf]
    %v266 = vld [vmem:[%s264 + $0x4] sm:$0xf]
    %v267 = vld [vmem:[%s264 + $0x8] sm:$0xf]
    %v268 = vld [vmem:[%s264 + $0xc] sm:$0xf]
    %v269 = vld [vmem:[%s264 + $0x10] sm:$0xf]
    %v270 = vld [vmem:[%s264 + $0x14] sm:$0xf]
    %v271 = vld [vmem:[%s264 + $0x18] sm:$0xf]
    %v272 = vld [vmem:[%s264 + $0x1c] sm:$0xf]
    %v273 = vld [vmem:[%s264 + $0x20] sm:$0xf]
    %v274 = vld [vmem:[%s264 + $0x24] sm:$0xf]
    %v275 = vld [vmem:[%s264 + $0x28] sm:$0xf]
    %v276 = vld [vmem:[%s264 + $0x2c] sm:$0xf]
    %v277 = vld [vmem:[%s264 + $0x30] sm:$0xf]
    %v278 = vld [vmem:[%s264 + $0x34] sm:$0xf]
    %v279 = vld [vmem:[%s264 + $0x38] sm:$0xf]
    %v280 = vld [vmem:[%s264 + $0x3c] sm:$0xf]
    %v281 = vld [vmem:[#allocation6 + $0x3] sm:$0x1]
    %v282 = vperm.slane %v281, 0
    %v299 = vunpack.c.l.b16 %v265
    %v300 = vunpack.c.l.b16 %v266
    %v301 = vunpack.c.l.b16 %v267
    %v302 = vunpack.c.l.b16 %v268
    %v303 = vunpack.c.l.b16 %v269
    %v304 = vunpack.c.l.b16 %v270
    %v305 = vunpack.c.l.b16 %v271
    %v306 = vunpack.c.l.b16 %v272
    %v307 = vunpack.c.l.b16 %v273
    %v308 = vunpack.c.l.b16 %v274
    %v309 = vunpack.c.l.b16 %v275
    %v310 = vunpack.c.l.b16 %v276
    %v311 = vunpack.c.l.b16 %v277
    %v312 = vunpack.c.l.b16 %v278
    %v313 = vunpack.c.l.b16 %v279
    %v314 = vunpack.c.l.b16 %v280
    %v315 = vpack.c.b16 %v300, %v299
    %v316 = vpack.c.b16 %v302, %v301
    %v317 = vpack.c.b16 %v304, %v303
    %v318 = vpack.c.b16 %v306, %v305
    %v319 = vpack.c.b16 %v308, %v307
    %v320 = vpack.c.b16 %v310, %v309
    %v321 = vpack.c.b16 %v312, %v311
    %v322 = vpack.c.b16 %v314, %v313
    %331 = vmatpush.bf16.msra.mxu0 %v322
    %332 = vmatpush.bf16.msra.mxu0 %v321
    %333 = vmatpush.bf16.msra.mxu0 %v320
    %334 = vmatpush.bf16.msra.mxu0 %v319
    %335 = vmatpush.bf16.msra.mxu0 %v318
    %336 = vmatpush.bf16.msra.mxu0 %v317
    %337 = vmatpush.bf16.msra.mxu0 %v316
    %338 = vmatpush.bf16.msra.mxu0 %v315
    %339 = vmatmul.bf16.gmra.mxu0 %v263
    %v340 = vpop.f32.mrf.mxu0
    %v341 = vadd.f32 %v282, %v340
    %v342 = vpop.f32.mrf.mxu0
    %343 = vdwg.mxu0
    %v344 = vmax.f32 %v341, %v99
    %v345 = vpack.c.bf16 %v344, %v344
    %s346 = scalar_lea.vmem [#allocation2], 192
    %v347 = vld [vmem:[%s346] sm:$0xf]
    %v348 = vld [vmem:[%s346 + $0x4] sm:$0xf]
    %v349 = vld [vmem:[%s346 + $0x8] sm:$0xf]
    %v350 = vld [vmem:[%s346 + $0xc] sm:$0xf]
    %v351 = vld [vmem:[%s346 + $0x10] sm:$0xf]
    %v352 = vld [vmem:[%s346 + $0x14] sm:$0xf]
    %v353 = vld [vmem:[%s346 + $0x18] sm:$0xf]
    %v354 = vld [vmem:[%s346 + $0x1c] sm:$0xf]
    %v355 = vld [vmem:[%s346 + $0x20] sm:$0xf]
    %v356 = vld [vmem:[%s346 + $0x24] sm:$0xf]
    %v357 = vld [vmem:[%s346 + $0x28] sm:$0xf]
    %v358 = vld [vmem:[%s346 + $0x2c] sm:$0xf]
    %v359 = vld [vmem:[%s346 + $0x30] sm:$0xf]
    %v360 = vld [vmem:[%s346 + $0x34] sm:$0xf]
    %v361 = vld [vmem:[%s346 + $0x38] sm:$0xf]
    %v362 = vld [vmem:[%s346 + $0x3c] sm:$0xf]
    %v363 = vld [vmem:[#allocation6 + $0x4] sm:$0x1]
    %v364 = vperm.slane %v363, 0
    %v381 = vunpack.c.l.b16 %v347
    %v382 = vunpack.c.l.b16 %v348
    %v383 = vunpack.c.l.b16 %v349
    %v384 = vunpack.c.l.b16 %v350
    %v385 = vunpack.c.l.b16 %v351
    %v386 = vunpack.c.l.b16 %v352
    %v387 = vunpack.c.l.b16 %v353
    %v388 = vunpack.c.l.b16 %v354
    %v389 = vunpack.c.l.b16 %v355
    %v390 = vunpack.c.l.b16 %v356
    %v391 = vunpack.c.l.b16 %v357
    %v392 = vunpack.c.l.b16 %v358
    %v393 = vunpack.c.l.b16 %v359
    %v394 = vunpack.c.l.b16 %v360
    %v395 = vunpack.c.l.b16 %v361
    %v396 = vunpack.c.l.b16 %v362
    %v397 = vpack.c.b16 %v382, %v381
    %v398 = vpack.c.b16 %v384, %v383
    %v399 = vpack.c.b16 %v386, %v385
    %v400 = vpack.c.b16 %v388, %v387
    %v401 = vpack.c.b16 %v390, %v389
    %v402 = vpack.c.b16 %v392, %v391
    %v403 = vpack.c.b16 %v394, %v393
    %v404 = vpack.c.b16 %v396, %v395
    %413 = vmatpush.bf16.msra.mxu0 %v404
    %414 = vmatpush.bf16.msra.mxu0 %v403
    %415 = vmatpush.bf16.msra.mxu0 %v402
    %416 = vmatpush.bf16.msra.mxu0 %v401
    %417 = vmatpush.bf16.msra.mxu0 %v400
    %418 = vmatpush.bf16.msra.mxu0 %v399
    %419 = vmatpush.bf16.msra.mxu0 %v398
    %420 = vmatpush.bf16.msra.mxu0 %v397
    %421 = vmatmul.bf16.gmra.mxu0 %v345
    %v422 = vpop.f32.mrf.mxu0
    %v423 = vadd.f32 %v364, %v422
    %v424 = vpop.f32.mrf.mxu0
    %425 = vdwg.mxu0
    %v426 = vmax.f32 %v423, %v99
    %v427 = vpack.c.bf16 %v426, %v426
    %v428 = vld [vmem:[#allocation4] sm:$0xf]
    %v429 = vld [vmem:[#allocation4 + $0x4] sm:$0xf]
    %v430 = vld [vmem:[#allocation4 + $0x8] sm:$0xf]
    %v431 = vld [vmem:[#allocation4 + $0xc] sm:$0xf]
    %v432 = vld [vmem:[#allocation4 + $0x10] sm:$0xf]
    %v433 = vld [vmem:[#allocation4 + $0x14] sm:$0xf]
    %v434 = vld [vmem:[#allocation4 + $0x18] sm:$0xf]
    %v435 = vld [vmem:[#allocation4 + $0x1c] sm:$0xf]
    %v436 = vld [vmem:[#allocation4 + $0x20] sm:$0xf]
    %v437 = vld [vmem:[#allocation4 + $0x24] sm:$0xf]
    %v438 = vld [vmem:[#allocation4 + $0x28] sm:$0xf]
    %v439 = vld [vmem:[#allocation4 + $0x2c] sm:$0xf]
    %v440 = vld [vmem:[#allocation4 + $0x30] sm:$0xf]
    %v441 = vld [vmem:[#allocation4 + $0x34] sm:$0xf]
    %v442 = vld [vmem:[#allocation4 + $0x38] sm:$0xf]
    %v443 = vld [vmem:[#allocation4 + $0x3c] sm:$0xf]
    %v444 = vld [vmem:[#allocation6 + $0x5] sm:$0x1]
    %v445 = vperm.slane %v444, 0
    %v462 = vunpack.c.l.b16 %v428
    %v463 = vunpack.c.l.b16 %v429
    %v464 = vunpack.c.l.b16 %v430
    %v465 = vunpack.c.l.b16 %v431
    %v466 = vunpack.c.l.b16 %v432
    %v467 = vunpack.c.l.b16 %v433
    %v468 = vunpack.c.l.b16 %v434
    %v469 = vunpack.c.l.b16 %v435
    %v470 = vunpack.c.l.b16 %v436
    %v471 = vunpack.c.l.b16 %v437
    %v472 = vunpack.c.l.b16 %v438
    %v473 = vunpack.c.l.b16 %v439
    %v474 = vunpack.c.l.b16 %v440
    %v475 = vunpack.c.l.b16 %v441
    %v476 = vunpack.c.l.b16 %v442
    %v477 = vunpack.c.l.b16 %v443
    %v478 = vpack.c.b16 %v463, %v462
    %v479 = vpack.c.b16 %v465, %v464
    %v480 = vpack.c.b16 %v467, %v466
    %v481 = vpack.c.b16 %v469, %v468
    %v482 = vpack.c.b16 %v471, %v470
    %v483 = vpack.c.b16 %v473, %v472
    %v484 = vpack.c.b16 %v475, %v474
    %v485 = vpack.c.b16 %v477, %v476
    %494 = vmatpush.bf16.msra.mxu0 %v485
    %495 = vmatpush.bf16.msra.mxu0 %v484
    %496 = vmatpush.bf16.msra.mxu0 %v483
    %497 = vmatpush.bf16.msra.mxu0 %v482
    %498 = vmatpush.bf16.msra.mxu0 %v481
    %499 = vmatpush.bf16.msra.mxu0 %v480
    %500 = vmatpush.bf16.msra.mxu0 %v479
    %501 = vmatpush.bf16.msra.mxu0 %v478
    %502 = vmatmul.bf16.gmra.mxu0 %v427
    %v503 = vpop.f32.mrf.mxu0
    %v504 = vadd.f32 %v445, %v503
    %v505 = vpop.f32.mrf.mxu0
    %506 = vdwg.mxu0
    %vm507 = vcmp.lt.s32.totalorder %v97, 8
    %v508 = vsel %vm507, 0.0, -inf
    %v509 = vmax.f32 %v504, %v508
    %vm510 = vcmp.lt.s32.totalorder %v97, 4
    %v511 = vsel %vm510, %v509, 0.0
    %512 = vadd.xlane.f32.xlu0 %v511
    %v513 = vpop.xlane.xlu0 %512
    %v514 = vmul.f32 %v513, 0.25
    %vm515 = vcmp.ge.s32.totalorder %v97, 4
    %vm516 = vmand %vm515, %vm507
    %v517 = vsel %vm516, %v509, 0.0
    %518 = vadd.xlane.f32.xlu0 %v517
    %v519 = vpop.xlane.xlu0 %518
    %v520 = vmul.f32 %v519, 0.25
    %vm521 = vcmp.eq.s32.totalorder %v97, 16
    %v522 = vsel %vm521, %v520, %v509
    %vm523 = vcmp.eq.s32.totalorder %v97, 17
    %v524 = vsel %vm523, %v514, %v522
    %v525 = vand.u32 2147483647, %v524
    %526 = vst [vmem:[%s5] sm:$0xff] %v525
    // Predicated region
    $region34: #{actor_mfg_forward.1} parent=1 // pred_check
      _
    $region35: #{actor_mfg_forward.1} parent=1 // pred_check_branch
      %528 = sbr.rel (0) target = $region37
    $region36: #{actor_mfg_forward.1} parent=1 // pred_region
      _
    $region37: #{actor_mfg_forward.1} parent=1 // pred_fallthru
      _
    // Predicated region
    $region38: #{actor_mfg_forward.1} parent=1 // pred_check
      _
    $region39: #{actor_mfg_forward.1} parent=1 // pred_check_branch
      %530 = sbr.rel (0) target = $region41
    $region40: #{actor_mfg_forward.1} parent=1 // pred_region
      _
    $region41: #{actor_mfg_forward.1} parent=1 // pred_fallthru
      _
    %531 = vsyncpa [#allocation3], 1
    %532 = vsyncpa [#allocation5], 1

</llo_original>
